<compile_context>
chip_gen: v6e
topology: v6e:2x2x1
jax: 0.10.0
libtpu: 0.0.40
codegen_flags: <defaults>
</compile_context>

<pallas_src>
import functools

import numpy as np
import jax
import jax.numpy as jnp
from jax.experimental import pallas as pl
from jax.experimental.pallas import tpu as pltpu

F32 = jnp.float32
BF16 = jnp.bfloat16
LRELU_SLOPE = 0.01  # PyTorch nn.LeakyReLU default negative_slope


def _leaky_relu(x):
    return jnp.where(x > 0, x, LRELU_SLOPE * x)


def _round_up(x, m):
    return (x + m - 1) // m * m


def _mm(a, b):
    # MXU matmul, always accumulate in f32.
    return jnp.dot(a, b, preferred_element_type=F32)


# ----------------------------------------------------------------------------
# Kernel: fused 3-layer edge MLP on one tile of edges.
#   x = LeakyReLU(x @ W1 + b1)      (x already = cat([e, m]), zero-padded)
#   x = LeakyReLU(x @ W2 + b2)
#   x = LeakyReLU(x @ W3 + b3)
# ----------------------------------------------------------------------------
def dti_edge_mlp_kernel(x_ref,
                        w1_ref, b1_ref,
                        w2_ref, b2_ref,
                        w3_ref, b3_ref,
                        out_ref, *, compute_dtype):
    x = _leaky_relu(_mm(x_ref[...], w1_ref[...]) + b1_ref[...])
    x = _leaky_relu(_mm(x.astype(compute_dtype), w2_ref[...]) + b2_ref[...])
    x = _leaky_relu(_mm(x.astype(compute_dtype), w3_ref[...]) + b3_ref[...])
    out_ref[...] = x.astype(out_ref.dtype)


# ----------------------------------------------------------------------------
# Wrapper
# ----------------------------------------------------------------------------
def dti_conv_graph3_forward(params, atom_feats, bond_feats, src, dst, *,
                            tile_e=4096, use_bf16=True):
    """DTIConvGraph3.forward(bg, atom_feats, bond_feats) with the graph given
    as explicit (src, dst) edge-index arrays.

    Returns updated edge features [E, out_dim] in the compute dtype (bf16 by
    default; pass use_bf16=False for an f32-exact path vs. the PyTorch ref).
    """
    N, Dn = atom_feats.shape
    E, De = bond_feats.shape
    Do = params['b3'].shape[-1]
    Din = De + Dn

    compute_dtype = BF16 if use_bf16 else F32

    # dgl u_add_v('h','h','m') + torch.cat([e, m], 1), then pad + cast.
    # gather-add + concat + pad + astype fuse into ONE XLA producer writing a
    # single lane-dense [E_pad, din_p] stream for the kernel.
    m = jnp.take(atom_feats, src, axis=0) + jnp.take(atom_feats, dst, axis=0)
    x = jnp.concatenate([bond_feats, m], axis=1)              # [E, De + Dn]

    # Lane-dense padding: feature dims -> multiples of 128.
    din_p = _round_up(Din, 128)
    do_p = _round_up(Do, 128)

    # Edge tile: multiple of 16 (bf16 sublane pack, also fine for f32), large
    # enough to amortize per-step overhead, capped so the grid keeps >= ~8
    # tiles (v7x megacore sharding of the "parallel" axis).
    te = min(tile_e, _round_up(pl.cdiv(E, 8), 16))
    te = max(te, 16)
    e_p = _round_up(E, te)

    def pad2(a, rows, cols, dtype):
        return jnp.pad(a, ((0, rows - a.shape[0]), (0, cols - a.shape[1]))).astype(dtype)

    x_pad = pad2(x, e_p, din_p, compute_dtype)

    w1 = pad2(params['w1'], din_p, do_p, compute_dtype)       # [Din_p, Do_p]
    b1 = pad2(params['b1'], 1, do_p, F32)
    w2 = pad2(params['w2'], do_p, do_p, compute_dtype)
    b2 = pad2(params['b2'], 1, do_p, F32)
    w3 = pad2(params['w3'], do_p, do_p, compute_dtype)
    b3 = pad2(params['b3'], 1, do_p, F32)

    grid = (e_p // te,)

    def row_spec(d):
        return pl.BlockSpec((te, d), lambda i: (i, 0))

    def const_spec(shape):
        return pl.BlockSpec(shape, lambda i: (0, 0))          # weights: stay resident

    out = pl.pallas_call(
        functools.partial(dti_edge_mlp_kernel, compute_dtype=compute_dtype),
        out_shape=jax.ShapeDtypeStruct((e_p, do_p), compute_dtype),
        grid_spec=pltpu.PrefetchScalarGridSpec(
            num_scalar_prefetch=0,
            grid=grid,
            in_specs=[
                row_spec(din_p),               # cat([e, m]) tile   [te, Din_p]
                const_spec((din_p, do_p)),     # W1
                const_spec((1, do_p)),         # b1
                const_spec((do_p, do_p)),      # W2
                const_spec((1, do_p)),         # b2
                const_spec((do_p, do_p)),      # W3
                const_spec((1, do_p)),         # b3
            ],
            out_specs=row_spec(do_p),
        ),
        compiler_params=pltpu.CompilerParams(
            dimension_semantics=("parallel",),                 # 2-TC sharding on v7x
            vmem_limit_bytes=32 * 1024 * 1024,
        ),
    )(x_pad, w1, b1, w2, b2, w3, b3)

    return out[:E, :Do]


# ----------------------------------------------------------------------------
# Parameter init (PyTorch nn.Linear default: U(-1/sqrt(fan_in), 1/sqrt(fan_in)))
# ----------------------------------------------------------------------------
def init_params(key, in_dim, out_dim):
    def linear(k, fi, fo):
        kw, kb = jax.random.split(k)
        bound = 1.0 / np.sqrt(fi)
        w = jax.random.uniform(kw, (fi, fo), F32, -bound, bound)
        b = jax.random.uniform(kb, (1, fo), F32, -bound, bound)
        return w, b

    k1, k2, k3 = jax.random.split(key, 3)
    w1, b1 = linear(k1, in_dim, out_dim)
    w2, b2 = linear(k2, out_dim, out_dim)
    w3, b3 = linear(k3, out_dim, out_dim)
    return dict(w1=w1, b1=b1, w2=w2, b2=b2, w3=w3, b3=b3)


# ----------------------------------------------------------------------------
# Pure-JAX reference (mirrors the PyTorch module exactly, f32 throughout)
# ----------------------------------------------------------------------------
def reference_forward(params, atom_feats, bond_feats, src, dst):
    m = atom_feats[src] + atom_feats[dst]
    x = jnp.concatenate([bond_feats, m], axis=1)
    x = _leaky_relu(x @ params['w1'] + params['b1'])
    x = _leaky_relu(x @ params['w2'] + params['b2'])
    x = _leaky_relu(x @ params['w3'] + params['b3'])
    return x


# ----------------------------------------------------------------------------
if __name__ == "__main__":
    key = jax.random.PRNGKey(0)
    N, E = 16, 48
    NODE_DIM, EDGE_DIM, OUT_DIM = 32, 33, 32          # in_dim = EDGE_DIM + NODE_DIM
    IN_DIM = EDGE_DIM + NODE_DIM

    k = jax.random.split(key, 5)
    atom_feats = jax.random.normal(k[0], (N, NODE_DIM), F32)   # bg.ndata['h']
    bond_feats = jax.random.normal(k[1], (E, EDGE_DIM), F32)   # bg.edata['e']
    src = jax.random.randint(k[2], (E,), 0, N)                 # bg.edges() src
    dst = jax.random.randint(k[3], (E,), 0, N)                 # bg.edges() dst
    params = init_params(k[4], IN_DIM, OUT_DIM)

    fwd = jax.jit(functools.partial(dti_conv_graph3_forward, params))
    out = fwd(atom_feats, bond_feats, src, dst)
    jax.block_until_ready(out)

    ref = reference_forward(params, atom_feats, bond_feats, src, dst)
    assert out.shape == (E, OUT_DIM)
    # bf16 MXU inputs + bf16 output with f32 accumulation -> loose tolerance
    # vs. the f32 reference (use use_bf16=False for near-exact parity).
    out_f32 = np.asarray(jnp.asarray(out, F32))
    np.testing.assert_allclose(out_f32, np.asarray(ref), rtol=1e-1, atol=1e-1)

    print("KERNEL_OK")
</pallas_src>

<mosaic_0001>
module attributes {stable_mosaic.version = 11 : i64} {
  func.func @dti_edge_mlp_kernel(%arg0: i32, %arg1: memref<16x128xbf16, #tpu.memory_space<vmem>>, %arg2: memref<128x128xbf16, #tpu.memory_space<vmem>>, %arg3: memref<1x128xf32, #tpu.memory_space<vmem>>, %arg4: memref<128x128xbf16, #tpu.memory_space<vmem>>, %arg5: memref<1x128xf32, #tpu.memory_space<vmem>>, %arg6: memref<128x128xbf16, #tpu.memory_space<vmem>>, %arg7: memref<1x128xf32, #tpu.memory_space<vmem>>, %arg8: memref<16x128xbf16, #tpu.memory_space<vmem>>) attributes {dimension_semantics = [#tpu.dimension_semantics<parallel>], iteration_bounds = array<i64: 3>, scalar_prefetch = 0 : i64, scratch_operands = 0 : i64, tpu.core_type = #tpu.core_type<tc>, window_params = [{transform_indices = @transform_0, window_bounds = array<i64: 16, 128>}, {pipeline_mode = #tpu.pipeline_mode<synchronous>, transform_indices = @transform_1, window_bounds = array<i64: 128, 128>}, {pipeline_mode = #tpu.pipeline_mode<synchronous>, transform_indices = @transform_2, window_bounds = array<i64: 1, 128>}, {pipeline_mode = #tpu.pipeline_mode<synchronous>, transform_indices = @transform_3, window_bounds = array<i64: 128, 128>}, {pipeline_mode = #tpu.pipeline_mode<synchronous>, transform_indices = @transform_4, window_bounds = array<i64: 1, 128>}, {pipeline_mode = #tpu.pipeline_mode<synchronous>, transform_indices = @transform_5, window_bounds = array<i64: 128, 128>}, {pipeline_mode = #tpu.pipeline_mode<synchronous>, transform_indices = @transform_6, window_bounds = array<i64: 1, 128>}, {transform_indices = @transform_7, window_bounds = array<i64: 16, 128>}]} {
    %c0 = arith.constant 0 : index
    %c0_0 = arith.constant 0 : index
    %0 = vector.load %arg1[%c0, %c0_0] : memref<16x128xbf16, #tpu.memory_space<vmem>>, vector<16x128xbf16>
    %c0_1 = arith.constant 0 : index
    %c0_2 = arith.constant 0 : index
    %1 = vector.load %arg2[%c0_1, %c0_2] : memref<128x128xbf16, #tpu.memory_space<vmem>>, vector<128x128xbf16>
    %cst = arith.constant dense<0.000000e+00> : vector<16x128xf32>
    %2 = tpu.matmul %0, %1, %cst {dimension_numbers = #tpu.dot_dimension_numbers<[1], [0], [0], [1], [0, 0, 1, 1], [], []>} : vector<16x128xbf16>, vector<128x128xbf16>, vector<16x128xf32> -> vector<16x128xf32>
    %c0_3 = arith.constant 0 : index
    %c0_4 = arith.constant 0 : index
    %3 = vector.load %arg3[%c0_3, %c0_4] : memref<1x128xf32, #tpu.memory_space<vmem>>, vector<1x128xf32>
    %4 = vector.broadcast %3 : vector<1x128xf32> to vector<16x128xf32>
    %5 = arith.addf %2, %4 : vector<16x128xf32>
    %cst_5 = arith.constant 0.000000e+00 : f32
    %6 = vector.broadcast %cst_5 : f32 to vector<16x128xf32>
    %7 = arith.cmpf ogt, %5, %6 : vector<16x128xf32>
    %cst_6 = arith.constant 0.00999999977 : f32
    %8 = vector.broadcast %cst_6 : f32 to vector<16x128xf32>
    %9 = arith.mulf %8, %5 : vector<16x128xf32>
    %10 = arith.select %7, %5, %9 : vector<16x128xi1>, vector<16x128xf32>
    %11 = arith.truncf %10 : vector<16x128xf32> to vector<16x128xbf16>
    %c0_7 = arith.constant 0 : index
    %c0_8 = arith.constant 0 : index
    %12 = vector.load %arg4[%c0_7, %c0_8] : memref<128x128xbf16, #tpu.memory_space<vmem>>, vector<128x128xbf16>
    %cst_9 = arith.constant dense<0.000000e+00> : vector<16x128xf32>
    %13 = tpu.matmul %11, %12, %cst_9 {dimension_numbers = #tpu.dot_dimension_numbers<[1], [0], [0], [1], [0, 0, 1, 1], [], []>} : vector<16x128xbf16>, vector<128x128xbf16>, vector<16x128xf32> -> vector<16x128xf32>
    %c0_10 = arith.constant 0 : index
    %c0_11 = arith.constant 0 : index
    %14 = vector.load %arg5[%c0_10, %c0_11] : memref<1x128xf32, #tpu.memory_space<vmem>>, vector<1x128xf32>
    %15 = vector.broadcast %14 : vector<1x128xf32> to vector<16x128xf32>
    %16 = arith.addf %13, %15 : vector<16x128xf32>
    %cst_12 = arith.constant 0.000000e+00 : f32
    %17 = vector.broadcast %cst_12 : f32 to vector<16x128xf32>
    %18 = arith.cmpf ogt, %16, %17 : vector<16x128xf32>
    %cst_13 = arith.constant 0.00999999977 : f32
    %19 = vector.broadcast %cst_13 : f32 to vector<16x128xf32>
    %20 = arith.mulf %19, %16 : vector<16x128xf32>
    %21 = arith.select %18, %16, %20 : vector<16x128xi1>, vector<16x128xf32>
    %22 = arith.truncf %21 : vector<16x128xf32> to vector<16x128xbf16>
    %c0_14 = arith.constant 0 : index
    %c0_15 = arith.constant 0 : index
    %23 = vector.load %arg6[%c0_14, %c0_15] : memref<128x128xbf16, #tpu.memory_space<vmem>>, vector<128x128xbf16>
    %cst_16 = arith.constant dense<0.000000e+00> : vector<16x128xf32>
    %24 = tpu.matmul %22, %23, %cst_16 {dimension_numbers = #tpu.dot_dimension_numbers<[1], [0], [0], [1], [0, 0, 1, 1], [], []>} : vector<16x128xbf16>, vector<128x128xbf16>, vector<16x128xf32> -> vector<16x128xf32>
    %c0_17 = arith.constant 0 : index
    %c0_18 = arith.constant 0 : index
    %25 = vector.load %arg7[%c0_17, %c0_18] : memref<1x128xf32, #tpu.memory_space<vmem>>, vector<1x128xf32>
    %26 = vector.broadcast %25 : vector<1x128xf32> to vector<16x128xf32>
    %27 = arith.addf %24, %26 : vector<16x128xf32>
    %cst_19 = arith.constant 0.000000e+00 : f32
    %28 = vector.broadcast %cst_19 : f32 to vector<16x128xf32>
    %29 = arith.cmpf ogt, %27, %28 : vector<16x128xf32>
    %cst_20 = arith.constant 0.00999999977 : f32
    %30 = vector.broadcast %cst_20 : f32 to vector<16x128xf32>
    %31 = arith.mulf %30, %27 : vector<16x128xf32>
    %32 = arith.select %29, %27, %31 : vector<16x128xi1>, vector<16x128xf32>
    %33 = arith.truncf %32 : vector<16x128xf32> to vector<16x128xbf16>
    %c0_21 = arith.constant 0 : index
    %c0_22 = arith.constant 0 : index
    %34 = vector.load %arg8[%c0_21, %c0_22] : memref<16x128xbf16, #tpu.memory_space<vmem>>, vector<16x128xbf16>
    tpu.vector_store %arg8[%c0_21, %c0_22], %33 {strides = array<i32>} : memref<16x128xbf16, #tpu.memory_space<vmem>>, vector<16x128xbf16>,
    return
  }
  func.func @transform_0(%arg0: i32) -> (i32, i32) {
    %c0_i32 = arith.constant 0 : i32
    %c0_i32_0 = arith.constant 0 : i32
    return %arg0, %c0_i32 : i32, i32
  }
  func.func @transform_1(%arg0: i32) -> (i32, i32) {
    %c0_i32 = arith.constant 0 : i32
    %c0_i32_0 = arith.constant 0 : i32
    %c0_i32_1 = arith.constant 0 : i32
    return %c0_i32, %c0_i32_0 : i32, i32
  }
  func.func @transform_2(%arg0: i32) -> (i32, i32) {
    %c0_i32 = arith.constant 0 : i32
    %c0_i32_0 = arith.constant 0 : i32
    %c0_i32_1 = arith.constant 0 : i32
    return %c0_i32, %c0_i32_0 : i32, i32
  }
  func.func @transform_3(%arg0: i32) -> (i32, i32) {
    %c0_i32 = arith.constant 0 : i32
    %c0_i32_0 = arith.constant 0 : i32
    %c0_i32_1 = arith.constant 0 : i32
    return %c0_i32, %c0_i32_0 : i32, i32
  }
  func.func @transform_4(%arg0: i32) -> (i32, i32) {
    %c0_i32 = arith.constant 0 : i32
    %c0_i32_0 = arith.constant 0 : i32
    %c0_i32_1 = arith.constant 0 : i32
    return %c0_i32, %c0_i32_0 : i32, i32
  }
  func.func @transform_5(%arg0: i32) -> (i32, i32) {
    %c0_i32 = arith.constant 0 : i32
    %c0_i32_0 = arith.constant 0 : i32
    %c0_i32_1 = arith.constant 0 : i32
    return %c0_i32, %c0_i32_0 : i32, i32
  }
  func.func @transform_6(%arg0: i32) -> (i32, i32) {
    %c0_i32 = arith.constant 0 : i32
    %c0_i32_0 = arith.constant 0 : i32
    %c0_i32_1 = arith.constant 0 : i32
    return %c0_i32, %c0_i32_0 : i32, i32
  }
  func.func @transform_7(%arg0: i32) -> (i32, i32) {
    %c0_i32 = arith.constant 0 : i32
    %c0_i32_0 = arith.constant 0 : i32
    return %arg0, %c0_i32 : i32, i32
  }
}

</mosaic_0001>

<llo_original>
// kernel: dti_conv_graph3_forward.1
$region0: #{dti_conv_graph3_forward.1}
  #allocation0 [shape = 'u32[]', space=smem, size = 0x4, offset = 0x4, fixed_abs, tag = 'smem constant byte address 0x4 - core index']
  #allocation1 [shape = 'u32[144,128]{1,0:T(1,128)}', space=vmem, size = 0x12000, scoped, tag = 'internal scratch']
  %s0 = inlined_call_operand.vmem [shape: bf16[48,128], index: 0, kind: input, shape index: {}]
  %s1 = inlined_call_operand.vmem [shape: bf16[128,128], index: 1, kind: input, shape index: {}]
  %s2 = inlined_call_operand.vmem [shape: f32[1,128], index: 2, kind: input, shape index: {}]
  %s3 = inlined_call_operand.vmem [shape: bf16[128,128], index: 3, kind: input, shape index: {}]
  %s4 = inlined_call_operand.vmem [shape: f32[1,128], index: 4, kind: input, shape index: {}]
  %s5 = inlined_call_operand.vmem [shape: bf16[128,128], index: 5, kind: input, shape index: {}]
  %s6 = inlined_call_operand.vmem [shape: f32[1,128], index: 6, kind: input, shape index: {}]
  %s7 = inlined_call_operand.vmem [shape: bf16[48,128], index: 7, kind: output, shape index: {}]
  %s8 = sld [smem:[#allocation0]]
  $region61: #{dti_conv_graph3_forward.1} parent=0
    _
  %s10 = ssub.s32 1, %s8
  %s11 = scalar_select 0, %s10, %s8
  loop: start=0, step=1, limit=5
  $region2: #{dti_conv_graph3_forward.1} parent=0 // loop_pre_header
    _
  $region3: #{dti_conv_graph3_forward.1} parent=0 // loop_header
    %s13 = sphi 0, %s17
    %p14 = scmp.ge.s32.totalorder %s13, 5
    %s23 = sphi 0, %s25
    %s26 = sphi 0, %s23
    %s27 = sphi 0, %s26
    %s43 = sphi 0, %s27
    %s47 = sphi 0, %s47
    %s49 = sphi 0, %s47
    %s50 = sphi 0, %s49
    %s64 = sphi 0, %s50
    %s68 = sphi 0, %s68
    %s70 = sphi 0, %s68
    %s71 = sphi 0, %s70
    %s85 = sphi 0, %s71
    %s89 = sphi 0, %s89
    %s91 = sphi 0, %s89
    %s92 = sphi 0, %s91
    %s106 = sphi 0, %s92
    %s110 = sphi 0, %s110
    %s112 = sphi 0, %s110
    %s113 = sphi 0, %s112
    %s127 = sphi 0, %s113
    %s131 = sphi 0, %s131
    %s133 = sphi 0, %s131
    %s134 = sphi 0, %s133
    %s148 = sphi 0, %s134
    %s152 = sphi 0, %s152
    %s154 = sphi 0, %s152
    %s155 = sphi 0, %s154
    %s169 = sphi 0, %s155
    %s175 = sphi 0, %s177
    %s178 = sphi 0, %s175
    %s179 = sphi 0, %s178
    %s195 = sphi 0, %s179
  $region4: #{dti_conv_graph3_forward.1} parent=0 // loop_header_branch
    %16 = sbr.rel (%p14) target = $region8
  $region5: #{dti_conv_graph3_forward.1} parent=0 // loop_body
    %s18 = ssub.s32 %s13, 1
    %s19 = ssub.s32 %s13, 2
    %s20 = sadd.s32 %s13, 1
    %s21 = ssub.s32 %s13, %s20
    %p22 = scmp.eq.s32.totalorder %s21, 0
    %s24 = sadd.s32 %s23, 1
    %s25 = scalar_select %p22, %s23, %s24
    %p28 = pneg %p22
    %p29 = scmp.eq.s32.totalorder %s13, 2
    %p30 = por %p28, %p29
    %p31 = scmp.ne.s32.totalorder %s23, %s26
    %p32 = scmp.eq.s32.totalorder %s13, 0
    %p33 = por %p31, %p32
    %p34 = scmp.ne.s32.totalorder %s23, %s26
    %p35 = scmp.eq.s32.totalorder %s18, 2
    %p36 = por %p34, %p35
    %p37 = scmp.ne.s32.totalorder %s26, %s27
    %p38 = scmp.eq.s32.totalorder %s18, 0
    %p39 = por %p37, %p38
    %p40 = scmp.ne.s32.totalorder %s26, %s27
    %p41 = scmp.eq.s32.totalorder %s19, 2
    %p42 = por %p40, %p41
    %p44 = scmp.ne.s32.totalorder %s27, %s43
    %p45 = scmp.eq.s32.totalorder %s19, 0
    %p46 = por %p44, %p45
    %s48 = sadd.s32 %s47, 1
    %p51 = scmp.eq.s32.totalorder %s13, 2
    %p52 = scmp.ne.s32.totalorder %s47, %s49
    %p53 = scmp.eq.s32.totalorder %s13, 0
    %p54 = por %p52, %p53
    %p55 = scmp.ne.s32.totalorder %s47, %s49
    %p56 = scmp.eq.s32.totalorder %s18, 2
    %p57 = por %p55, %p56
    %p58 = scmp.ne.s32.totalorder %s49, %s50
    %p59 = scmp.eq.s32.totalorder %s18, 0
    %p60 = por %p58, %p59
    %p61 = scmp.ne.s32.totalorder %s49, %s50
    %p62 = scmp.eq.s32.totalorder %s19, 2
    %p63 = por %p61, %p62
    %p65 = scmp.ne.s32.totalorder %s50, %s64
    %p66 = scmp.eq.s32.totalorder %s19, 0
    %p67 = por %p65, %p66
    %s69 = sadd.s32 %s68, 1
    %p72 = scmp.eq.s32.totalorder %s13, 2
    %p73 = scmp.ne.s32.totalorder %s68, %s70
    %p74 = scmp.eq.s32.totalorder %s13, 0
    %p75 = por %p73, %p74
    %p76 = scmp.ne.s32.totalorder %s68, %s70
    %p77 = scmp.eq.s32.totalorder %s18, 2
    %p78 = por %p76, %p77
    %p79 = scmp.ne.s32.totalorder %s70, %s71
    %p80 = scmp.eq.s32.totalorder %s18, 0
    %p81 = por %p79, %p80
    %p82 = scmp.ne.s32.totalorder %s70, %s71
    %p83 = scmp.eq.s32.totalorder %s19, 2
    %p84 = por %p82, %p83
    %p86 = scmp.ne.s32.totalorder %s71, %s85
    %p87 = scmp.eq.s32.totalorder %s19, 0
    %p88 = por %p86, %p87
    %s90 = sadd.s32 %s89, 1
    %p93 = scmp.eq.s32.totalorder %s13, 2
    %p94 = scmp.ne.s32.totalorder %s89, %s91
    %p95 = scmp.eq.s32.totalorder %s13, 0
    %p96 = por %p94, %p95
    %p97 = scmp.ne.s32.totalorder %s89, %s91
    %p98 = scmp.eq.s32.totalorder %s18, 2
    %p99 = por %p97, %p98
    %p100 = scmp.ne.s32.totalorder %s91, %s92
    %p101 = scmp.eq.s32.totalorder %s18, 0
    %p102 = por %p100, %p101
    %p103 = scmp.ne.s32.totalorder %s91, %s92
    %p104 = scmp.eq.s32.totalorder %s19, 2
    %p105 = por %p103, %p104
    %p107 = scmp.ne.s32.totalorder %s92, %s106
    %p108 = scmp.eq.s32.totalorder %s19, 0
    %p109 = por %p107, %p108
    %s111 = sadd.s32 %s110, 1
    %p114 = scmp.eq.s32.totalorder %s13, 2
    %p115 = scmp.ne.s32.totalorder %s110, %s112
    %p116 = scmp.eq.s32.totalorder %s13, 0
    %p117 = por %p115, %p116
    %p118 = scmp.ne.s32.totalorder %s110, %s112
    %p119 = scmp.eq.s32.totalorder %s18, 2
    %p120 = por %p118, %p119
    %p121 = scmp.ne.s32.totalorder %s112, %s113
    %p122 = scmp.eq.s32.totalorder %s18, 0
    %p123 = por %p121, %p122
    %p124 = scmp.ne.s32.totalorder %s112, %s113
    %p125 = scmp.eq.s32.totalorder %s19, 2
    %p126 = por %p124, %p125
    %p128 = scmp.ne.s32.totalorder %s113, %s127
    %p129 = scmp.eq.s32.totalorder %s19, 0
    %p130 = por %p128, %p129
    %s132 = sadd.s32 %s131, 1
    %p135 = scmp.eq.s32.totalorder %s13, 2
    %p136 = scmp.ne.s32.totalorder %s131, %s133
    %p137 = scmp.eq.s32.totalorder %s13, 0
    %p138 = por %p136, %p137
    %p139 = scmp.ne.s32.totalorder %s131, %s133
    %p140 = scmp.eq.s32.totalorder %s18, 2
    %p141 = por %p139, %p140
    %p142 = scmp.ne.s32.totalorder %s133, %s134
    %p143 = scmp.eq.s32.totalorder %s18, 0
    %p144 = por %p142, %p143
    %p145 = scmp.ne.s32.totalorder %s133, %s134
    %p146 = scmp.eq.s32.totalorder %s19, 2
    %p147 = por %p145, %p146
    %p149 = scmp.ne.s32.totalorder %s134, %s148
    %p150 = scmp.eq.s32.totalorder %s19, 0
    %p151 = por %p149, %p150
    %s153 = sadd.s32 %s152, 1
    %p156 = scmp.eq.s32.totalorder %s13, 2
    %p157 = scmp.ne.s32.totalorder %s152, %s154
    %p158 = scmp.eq.s32.totalorder %s13, 0
    %p159 = por %p157, %p158
    %p160 = scmp.ne.s32.totalorder %s152, %s154
    %p161 = scmp.eq.s32.totalorder %s18, 2
    %p162 = por %p160, %p161
    %p163 = scmp.ne.s32.totalorder %s154, %s155
    %p164 = scmp.eq.s32.totalorder %s18, 0
    %p165 = por %p163, %p164
    %p166 = scmp.ne.s32.totalorder %s154, %s155
    %p167 = scmp.eq.s32.totalorder %s19, 2
    %p168 = por %p166, %p167
    %p170 = scmp.ne.s32.totalorder %s155, %s169
    %p171 = scmp.eq.s32.totalorder %s19, 0
    %p172 = por %p170, %p171
    %s173 = ssub.s32 %s13, %s20
    %p174 = scmp.eq.s32.totalorder %s173, 0
    %s176 = sadd.s32 %s175, 1
    %s177 = scalar_select %p174, %s175, %s176
    %p180 = pneg %p174
    %p181 = scmp.eq.s32.totalorder %s13, 2
    %p182 = por %p180, %p181
    %p183 = scmp.ne.s32.totalorder %s175, %s178
    %p184 = scmp.eq.s32.totalorder %s13, 0
    %p185 = por %p183, %p184
    %p186 = scmp.ne.s32.totalorder %s175, %s178
    %p187 = scmp.eq.s32.totalorder %s18, 2
    %p188 = por %p186, %p187
    %p189 = scmp.ne.s32.totalorder %s178, %s179
    %p190 = scmp.eq.s32.totalorder %s18, 0
    %p191 = por %p189, %p190
    %p192 = scmp.ne.s32.totalorder %s178, %s179
    %p193 = scmp.eq.s32.totalorder %s19, 2
    %p194 = por %p192, %p193
    %p196 = scmp.ne.s32.totalorder %s179, %s195
    %p197 = scmp.eq.s32.totalorder %s19, 0
    %p198 = por %p196, %p197
    %p199 = scmp.le.s32.totalorder 1, %s13
    %p200 = scmp.lt.s32.totalorder %s13, 4
    %p201 = pnand %p199, %p200
    %p202 = pneg %p201
    // Predicated region
    $region9: #{dti_conv_graph3_forward.1} parent=5 // pred_check
      _
    $region10: #{dti_conv_graph3_forward.1} parent=5 // pred_check_branch
      %204 = sbr.rel (%p201) target = $region12
    $region11: #{dti_conv_graph3_forward.1} parent=5 // pred_region
      %s205 = ssub.s32 %s13, 1
      // Predicated region
      $region13: #{dti_conv_graph3_forward.1} parent=11 // pred_check
        %p206 = pneg %p60
      $region14: #{dti_conv_graph3_forward.1} parent=11 // pred_check_branch
        %208 = sbr.rel (%p206) target = $region16
      $region15: #{dti_conv_graph3_forward.1} parent=11 // pred_region
        _
      $region16: #{dti_conv_graph3_forward.1} parent=11 // pred_fallthru
        _
      // Predicated region
      $region17: #{dti_conv_graph3_forward.1} parent=11 // pred_check
        %p209 = pneg %p81
      $region18: #{dti_conv_graph3_forward.1} parent=11 // pred_check_branch
        %211 = sbr.rel (%p209) target = $region20
      $region19: #{dti_conv_graph3_forward.1} parent=11 // pred_region
        _
      $region20: #{dti_conv_graph3_forward.1} parent=11 // pred_fallthru
        _
      // Predicated region
      $region21: #{dti_conv_graph3_forward.1} parent=11 // pred_check
        %p212 = pneg %p102
      $region22: #{dti_conv_graph3_forward.1} parent=11 // pred_check_branch
        %214 = sbr.rel (%p212) target = $region24
      $region23: #{dti_conv_graph3_forward.1} parent=11 // pred_region
        _
      $region24: #{dti_conv_graph3_forward.1} parent=11 // pred_fallthru
        _
      // Predicated region
      $region25: #{dti_conv_graph3_forward.1} parent=11 // pred_check
        %p215 = pneg %p123
      $region26: #{dti_conv_graph3_forward.1} parent=11 // pred_check_branch
        %217 = sbr.rel (%p215) target = $region28
      $region27: #{dti_conv_graph3_forward.1} parent=11 // pred_region
        _
      $region28: #{dti_conv_graph3_forward.1} parent=11 // pred_fallthru
        _
      // Predicated region
      $region29: #{dti_conv_graph3_forward.1} parent=11 // pred_check
        %p218 = pneg %p144
      $region30: #{dti_conv_graph3_forward.1} parent=11 // pred_check_branch
        %220 = sbr.rel (%p218) target = $region32
      $region31: #{dti_conv_graph3_forward.1} parent=11 // pred_region
        _
      $region32: #{dti_conv_graph3_forward.1} parent=11 // pred_fallthru
        _
      // Predicated region
      $region33: #{dti_conv_graph3_forward.1} parent=11 // pred_check
        %p221 = pneg %p165
      $region34: #{dti_conv_graph3_forward.1} parent=11 // pred_check_branch
        %223 = sbr.rel (%p221) target = $region36
      $region35: #{dti_conv_graph3_forward.1} parent=11 // pred_region
        _
      $region36: #{dti_conv_graph3_forward.1} parent=11 // pred_fallthru
        _
    $region12: #{dti_conv_graph3_forward.1} parent=5 // pred_fallthru
      _
    %p224 = scmp.lt.s32.totalorder %s13, 3
    // Predicated region
    $region37: #{dti_conv_graph3_forward.1} parent=5 // pred_check
      %p225 = pneg %p224
    $region38: #{dti_conv_graph3_forward.1} parent=5 // pred_check_branch
      %227 = sbr.rel (%p225) target = $region40
    $region39: #{dti_conv_graph3_forward.1} parent=5 // pred_region
      // Predicated region
      $region41: #{dti_conv_graph3_forward.1} parent=39 // pred_check
        %p228 = pneg %p33
      $region42: #{dti_conv_graph3_forward.1} parent=39 // pred_check_branch
        %230 = sbr.rel (%p228) target = $region44
      $region43: #{dti_conv_graph3_forward.1} parent=39 // pred_region
        %s231 = smul.u32 2, %s13
        %p232 = scmp.lt.s32.totalorder %s231, 5
        %s233 = scalar_select %p232, %s231, 5
        %s234 = smul.addr %s233, 4
        %s235 = scalar_lea.vmem %s0, %s234
        %s236 = smul.u32 2, %s13
      $region44: #{dti_conv_graph3_forward.1} parent=39 // pred_fallthru
        _
    $region40: #{dti_conv_graph3_forward.1} parent=5 // pred_fallthru
      _
    %p237 = scmp.le.s32.totalorder 1, %s13
    %p238 = scmp.lt.s32.totalorder %s13, 4
    %p239 = pnand %p237, %p238
    %p240 = pneg %p239
    // Predicated region
    $region45: #{dti_conv_graph3_forward.1} parent=5 // pred_check
      _
    $region46: #{dti_conv_graph3_forward.1} parent=5 // pred_check_branch
      %242 = sbr.rel (%p239) target = $region48
    $region47: #{dti_conv_graph3_forward.1} parent=5 // pred_region
      %s243 = ssub.s32 %s13, 1
      %s244 = smul.u32 2, %s18
      %p245 = scmp.lt.s32.totalorder %s244, 5
      %s246 = scalar_select %p245, %s244, 5
      %s247 = smul.addr %s246, 4
      %s248 = scalar_lea.vmem %s0, %s247
      %p249 = pneg %p39
      %p250 = pneg %p36
      %p251 = pneg %p60
      %p252 = pneg %p57
      %p253 = pneg %p81
      %p254 = pneg %p78
      %p255 = pneg %p102
      %p256 = pneg %p99
      %p257 = pneg %p123
      %p258 = pneg %p120
      %p259 = pneg %p144
      %p260 = pneg %p141
      %p261 = pneg %p165
      %p262 = pneg %p162
      %p263 = pneg %p191
      %p264 = pneg %p188
      %s265 = smul.u32 2, %s18
      %p266 = scmp.lt.s32.totalorder %s265, 5
      %s267 = scalar_select %p266, %s265, 5
      %s268 = smul.addr %s267, 4
      %s269 = scalar_lea.vmem %s7, %s268
      %s270 = smul.u32 2, %s18
      %p271 = scmp.lt.s32.totalorder %s270, 5
      %s272 = scalar_select %p271, %s270, 5
      %s273 = smul.addr %s272, 4
      %s274 = scalar_lea.vmem %s0, %s273
      %s275 = smul.u32 2, %s18
      %s276 = smul.u32 2, %s18
      %p277 = scmp.lt.s32.totalorder %s276, 5
      %s278 = scalar_select %p277, %s276, 5
      %s279 = smul.addr %s278, 4
      %s280 = scalar_lea.vmem %s7, %s279
      %s281 = smul.u32 2, %s18
      %v283 = vld [vmem:[%s274] sm:$0xf]
      %v284 = vld [vmem:[%s274 + $0x4] sm:$0xf]
      %v285 = vld [vmem:[%s1] sm:$0xf]
      %v286 = vld [vmem:[%s1 + $0x4] sm:$0xf]
      %v287 = vld [vmem:[%s1 + $0x8] sm:$0xf]
      %v288 = vld [vmem:[%s1 + $0xc] sm:$0xf]
      %v289 = vld [vmem:[%s1 + $0x10] sm:$0xf]
      %v290 = vld [vmem:[%s1 + $0x14] sm:$0xf]
      %v291 = vld [vmem:[%s1 + $0x18] sm:$0xf]
      %v292 = vld [vmem:[%s1 + $0x1c] sm:$0xf]
      %v293 = vld [vmem:[%s1 + $0x20] sm:$0xf]
      %v294 = vld [vmem:[%s1 + $0x24] sm:$0xf]
      %v295 = vld [vmem:[%s1 + $0x28] sm:$0xf]
      %v296 = vld [vmem:[%s1 + $0x2c] sm:$0xf]
      %v297 = vld [vmem:[%s1 + $0x30] sm:$0xf]
      %v298 = vld [vmem:[%s1 + $0x34] sm:$0xf]
      %v299 = vld [vmem:[%s1 + $0x38] sm:$0xf]
      %v300 = vld [vmem:[%s1 + $0x3c] sm:$0xf]
      %v301 = vld [vmem:[%s2] sm:$0x1]
      %v303 = vlaneseq
      %v304 = vshrl.u32 %v303, 7
      %v305 = vsub.s32 0, %v304
      %v306 = vrot.slane %v301, %v305
      %v310 = vunpack.c.l.b16 %v283
      %v311 = vunpack.c.l.b16 %v284
      %v312 = vpack.c.b16 %v311, %v310
      %v330 = vunpack.c.l.b16 %v285
      %v331 = vunpack.c.l.b16 %v286
      %v332 = vunpack.c.l.b16 %v287
      %v333 = vunpack.c.l.b16 %v288
      %v334 = vunpack.c.l.b16 %v289
      %v335 = vunpack.c.l.b16 %v290
      %v336 = vunpack.c.l.b16 %v291
      %v337 = vunpack.c.l.b16 %v292
      %v338 = vunpack.c.l.b16 %v293
      %v339 = vunpack.c.l.b16 %v294
      %v340 = vunpack.c.l.b16 %v295
      %v341 = vunpack.c.l.b16 %v296
      %v342 = vunpack.c.l.b16 %v297
      %v343 = vunpack.c.l.b16 %v298
      %v344 = vunpack.c.l.b16 %v299
      %v345 = vunpack.c.l.b16 %v300
      %v346 = vpack.c.b16 %v331, %v330
      %v347 = vpack.c.b16 %v333, %v332
      %v348 = vpack.c.b16 %v335, %v334
      %v349 = vpack.c.b16 %v337, %v336
      %v350 = vpack.c.b16 %v339, %v338
      %v351 = vpack.c.b16 %v341, %v340
      %v352 = vpack.c.b16 %v343, %v342
      %v353 = vpack.c.b16 %v345, %v344
      %362 = vmatprep.subr.bf16.mxu0 0
      %363 = vmatpush1.bf16.msra.mxu0 %v353
      %364 = vmatprep.subr.bf16.mxu0 0
      %365 = vmatpush1.bf16.msra.mxu0 %v352
      %366 = vmatprep.subr.bf16.mxu0 0
      %367 = vmatpush1.bf16.msra.mxu0 %v351
      %368 = vmatprep.subr.bf16.mxu0 0
      %369 = vmatpush1.bf16.msra.mxu0 %v350
      %370 = vmatprep.subr.bf16.mxu0 0
      %371 = vmatpush1.bf16.msra.mxu0 %v349
      %372 = vmatprep.subr.bf16.mxu0 0
      %373 = vmatpush1.bf16.msra.mxu0 %v348
      %374 = vmatprep.subr.bf16.mxu0 0
      %375 = vmatpush1.bf16.msra.mxu0 %v347
      %376 = vmatprep.subr.bf16.mxu0 0
      %377 = vmatpush1.bf16.msra.mxu0 %v346
      %378 = vmatprep.subr.bf16.mxu0 0
      %379 = vmatpush2.bf16.msra.mxu0 0
      %380 = vmatprep.subr.bf16.mxu0 0
      %381 = vmatpush2.bf16.msra.mxu0 0
      %382 = vmatprep.subr.bf16.mxu0 0
      %383 = vmatpush2.bf16.msra.mxu0 0
      %384 = vmatprep.subr.bf16.mxu0 0
      %385 = vmatpush2.bf16.msra.mxu0 0
      %386 = vmatprep.subr.bf16.mxu0 0
      %387 = vmatpush2.bf16.msra.mxu0 0
      %388 = vmatprep.subr.bf16.mxu0 0
      %389 = vmatpush2.bf16.msra.mxu0 0
      %390 = vmatprep.subr.bf16.mxu0 0
      %391 = vmatpush2.bf16.msra.mxu0 0
      %392 = vmatprep.subr.bf16.mxu0 0
      %393 = vmatpush2.bf16.msra.mxu0 0
      %394 = vmatprep.mubr.bf16.mxu0 0
      %395 = vmatmul.mubr.bf16.gmra.mxu0 %v312
      %v396 = vpop.f32.mrf.mxu0
      %v397 = vadd.f32 %v306, %v396
      %v398 = vpop.f32.mrf.mxu0
      %v399 = vpop.f32.mrf.mxu0
      %v400 = vadd.f32 %v306, %v399
      %v401 = vpop.f32.mrf.mxu0
      %402 = vdwg.mxu0
      %vm403 = vcmp.gt.f32.partialorder %v397, 0.0
      %vm404 = vcmp.gt.f32.partialorder %v400, 0.0
      %v405 = vmul.f32 %v397, 0.01
      %v406 = vmul.f32 %v400, 0.01
      %v407 = vsel %vm403, %v397, %v405
      %v408 = vsel %vm404, %v400, %v406
      %v409 = vpack.c.bf16 %v408, %v407
      %v410 = vld [vmem:[%s3] sm:$0xf]
      %v411 = vld [vmem:[%s3 + $0x4] sm:$0xf]
      %v412 = vld [vmem:[%s3 + $0x8] sm:$0xf]
      %v413 = vld [vmem:[%s3 + $0xc] sm:$0xf]
      %v414 = vld [vmem:[%s3 + $0x10] sm:$0xf]
      %v415 = vld [vmem:[%s3 + $0x14] sm:$0xf]
      %v416 = vld [vmem:[%s3 + $0x18] sm:$0xf]
      %v417 = vld [vmem:[%s3 + $0x1c] sm:$0xf]
      %v418 = vld [vmem:[%s3 + $0x20] sm:$0xf]
      %v419 = vld [vmem:[%s3 + $0x24] sm:$0xf]
      %v420 = vld [vmem:[%s3 + $0x28] sm:$0xf]
      %v421 = vld [vmem:[%s3 + $0x2c] sm:$0xf]
      %v422 = vld [vmem:[%s3 + $0x30] sm:$0xf]
      %v423 = vld [vmem:[%s3 + $0x34] sm:$0xf]
      %v424 = vld [vmem:[%s3 + $0x38] sm:$0xf]
      %v425 = vld [vmem:[%s3 + $0x3c] sm:$0xf]
      %v426 = vld [vmem:[%s4] sm:$0x1]
      %v428 = vlaneseq
      %v429 = vshrl.u32 %v428, 7
      %v430 = vsub.s32 0, %v429
      %v431 = vrot.slane %v426, %v430
      %v449 = vunpack.c.l.b16 %v410
      %v450 = vunpack.c.l.b16 %v411
      %v451 = vunpack.c.l.b16 %v412
      %v452 = vunpack.c.l.b16 %v413
      %v453 = vunpack.c.l.b16 %v414
      %v454 = vunpack.c.l.b16 %v415
      %v455 = vunpack.c.l.b16 %v416
      %v456 = vunpack.c.l.b16 %v417
      %v457 = vunpack.c.l.b16 %v418
      %v458 = vunpack.c.l.b16 %v419
      %v459 = vunpack.c.l.b16 %v420
      %v460 = vunpack.c.l.b16 %v421
      %v461 = vunpack.c.l.b16 %v422
      %v462 = vunpack.c.l.b16 %v423
      %v463 = vunpack.c.l.b16 %v424
      %v464 = vunpack.c.l.b16 %v425
      %v465 = vpack.c.b16 %v450, %v449
      %v466 = vpack.c.b16 %v452, %v451
      %v467 = vpack.c.b16 %v454, %v453
      %v468 = vpack.c.b16 %v456, %v455
      %v469 = vpack.c.b16 %v458, %v457
      %v470 = vpack.c.b16 %v460, %v459
      %v471 = vpack.c.b16 %v462, %v461
      %v472 = vpack.c.b16 %v464, %v463
      %481 = vmatprep.subr.bf16.mxu0 0
      %482 = vmatpush1.bf16.msra.mxu0 %v472
      %483 = vmatprep.subr.bf16.mxu0 0
      %484 = vmatpush1.bf16.msra.mxu0 %v471
      %485 = vmatprep.subr.bf16.mxu0 0
      %486 = vmatpush1.bf16.msra.mxu0 %v470
      %487 = vmatprep.subr.bf16.mxu0 0
      %488 = vmatpush1.bf16.msra.mxu0 %v469
      %489 = vmatprep.subr.bf16.mxu0 0
      %490 = vmatpush1.bf16.msra.mxu0 %v468
      %491 = vmatprep.subr.bf16.mxu0 0
      %492 = vmatpush1.bf16.msra.mxu0 %v467
      %493 = vmatprep.subr.bf16.mxu0 0
      %494 = vmatpush1.bf16.msra.mxu0 %v466
      %495 = vmatprep.subr.bf16.mxu0 0
      %496 = vmatpush1.bf16.msra.mxu0 %v465
      %497 = vmatprep.subr.bf16.mxu0 0
      %498 = vmatpush2.bf16.msra.mxu0 0
      %499 = vmatprep.subr.bf16.mxu0 0
      %500 = vmatpush2.bf16.msra.mxu0 0
      %501 = vmatprep.subr.bf16.mxu0 0
      %502 = vmatpush2.bf16.msra.mxu0 0
      %503 = vmatprep.subr.bf16.mxu0 0
      %504 = vmatpush2.bf16.msra.mxu0 0
      %505 = vmatprep.subr.bf16.mxu0 0
      %506 = vmatpush2.bf16.msra.mxu0 0
      %507 = vmatprep.subr.bf16.mxu0 0
      %508 = vmatpush2.bf16.msra.mxu0 0
      %509 = vmatprep.subr.bf16.mxu0 0
      %510 = vmatpush2.bf16.msra.mxu0 0
      %511 = vmatprep.subr.bf16.mxu0 0
      %512 = vmatpush2.bf16.msra.mxu0 0
      %513 = vmatprep.mubr.bf16.mxu0 0
      %514 = vmatmul.mubr.bf16.gmra.mxu0 %v409
      %v515 = vpop.f32.mrf.mxu0
      %v516 = vadd.f32 %v431, %v515
      %v517 = vpop.f32.mrf.mxu0
      %v518 = vpop.f32.mrf.mxu0
      %v519 = vadd.f32 %v431, %v518
      %v520 = vpop.f32.mrf.mxu0
      %521 = vdwg.mxu0
      %vm522 = vcmp.gt.f32.partialorder %v516, 0.0
      %vm523 = vcmp.gt.f32.partialorder %v519, 0.0
      %v524 = vmul.f32 %v516, 0.01
      %v525 = vmul.f32 %v519, 0.01
      %v526 = vsel %vm522, %v516, %v524
      %v527 = vsel %vm523, %v519, %v525
      %v528 = vpack.c.bf16 %v527, %v526
      %v529 = vld [vmem:[%s5] sm:$0xf]
      %v530 = vld [vmem:[%s5 + $0x4] sm:$0xf]
      %v531 = vld [vmem:[%s5 + $0x8] sm:$0xf]
      %v532 = vld [vmem:[%s5 + $0xc] sm:$0xf]
      %v533 = vld [vmem:[%s5 + $0x10] sm:$0xf]
      %v534 = vld [vmem:[%s5 + $0x14] sm:$0xf]
      %v535 = vld [vmem:[%s5 + $0x18] sm:$0xf]
      %v536 = vld [vmem:[%s5 + $0x1c] sm:$0xf]
      %v537 = vld [vmem:[%s5 + $0x20] sm:$0xf]
      %v538 = vld [vmem:[%s5 + $0x24] sm:$0xf]
      %v539 = vld [vmem:[%s5 + $0x28] sm:$0xf]
      %v540 = vld [vmem:[%s5 + $0x2c] sm:$0xf]
      %v541 = vld [vmem:[%s5 + $0x30] sm:$0xf]
      %v542 = vld [vmem:[%s5 + $0x34] sm:$0xf]
      %v543 = vld [vmem:[%s5 + $0x38] sm:$0xf]
      %v544 = vld [vmem:[%s5 + $0x3c] sm:$0xf]
      %v545 = vld [vmem:[%s6] sm:$0x1]
      %v547 = vlaneseq
      %v548 = vshrl.u32 %v547, 7
      %v549 = vsub.s32 0, %v548
      %v550 = vrot.slane %v545, %v549
      %v568 = vunpack.c.l.b16 %v529
      %v569 = vunpack.c.l.b16 %v530
      %v570 = vunpack.c.l.b16 %v531
      %v571 = vunpack.c.l.b16 %v532
      %v572 = vunpack.c.l.b16 %v533
      %v573 = vunpack.c.l.b16 %v534
      %v574 = vunpack.c.l.b16 %v535
      %v575 = vunpack.c.l.b16 %v536
      %v576 = vunpack.c.l.b16 %v537
      %v577 = vunpack.c.l.b16 %v538
      %v578 = vunpack.c.l.b16 %v539
      %v579 = vunpack.c.l.b16 %v540
      %v580 = vunpack.c.l.b16 %v541
      %v581 = vunpack.c.l.b16 %v542
      %v582 = vunpack.c.l.b16 %v543
      %v583 = vunpack.c.l.b16 %v544
      %v584 = vpack.c.b16 %v569, %v568
      %v585 = vpack.c.b16 %v571, %v570
      %v586 = vpack.c.b16 %v573, %v572
      %v587 = vpack.c.b16 %v575, %v574
      %v588 = vpack.c.b16 %v577, %v576
      %v589 = vpack.c.b16 %v579, %v578
      %v590 = vpack.c.b16 %v581, %v580
      %v591 = vpack.c.b16 %v583, %v582
      %600 = vmatprep.subr.bf16.mxu0 0
      %601 = vmatpush1.bf16.msra.mxu0 %v591
      %602 = vmatprep.subr.bf16.mxu0 0
      %603 = vmatpush1.bf16.msra.mxu0 %v590
      %604 = vmatprep.subr.bf16.mxu0 0
      %605 = vmatpush1.bf16.msra.mxu0 %v589
      %606 = vmatprep.subr.bf16.mxu0 0
      %607 = vmatpush1.bf16.msra.mxu0 %v588
      %608 = vmatprep.subr.bf16.mxu0 0
      %609 = vmatpush1.bf16.msra.mxu0 %v587
      %610 = vmatprep.subr.bf16.mxu0 0
      %611 = vmatpush1.bf16.msra.mxu0 %v586
      %612 = vmatprep.subr.bf16.mxu0 0
      %613 = vmatpush1.bf16.msra.mxu0 %v585
      %614 = vmatprep.subr.bf16.mxu0 0
      %615 = vmatpush1.bf16.msra.mxu0 %v584
      %616 = vmatprep.subr.bf16.mxu0 0
      %617 = vmatpush2.bf16.msra.mxu0 0
      %618 = vmatprep.subr.bf16.mxu0 0
      %619 = vmatpush2.bf16.msra.mxu0 0
      %620 = vmatprep.subr.bf16.mxu0 0
      %621 = vmatpush2.bf16.msra.mxu0 0
      %622 = vmatprep.subr.bf16.mxu0 0
      %623 = vmatpush2.bf16.msra.mxu0 0
      %624 = vmatprep.subr.bf16.mxu0 0
      %625 = vmatpush2.bf16.msra.mxu0 0
      %626 = vmatprep.subr.bf16.mxu0 0
      %627 = vmatpush2.bf16.msra.mxu0 0
      %628 = vmatprep.subr.bf16.mxu0 0
      %629 = vmatpush2.bf16.msra.mxu0 0
      %630 = vmatprep.subr.bf16.mxu0 0
      %631 = vmatpush2.bf16.msra.mxu0 0
      %632 = vmatprep.mubr.bf16.mxu0 0
      %633 = vmatmul.mubr.bf16.gmra.mxu0 %v528
      %v634 = vpop.f32.mrf.mxu0
      %v635 = vadd.f32 %v550, %v634
      %v636 = vpop.f32.mrf.mxu0
      %v637 = vpop.f32.mrf.mxu0
      %v638 = vadd.f32 %v550, %v637
      %v639 = vpop.f32.mrf.mxu0
      %640 = vdwg.mxu0
      %vm641 = vcmp.gt.f32.partialorder %v635, 0.0
      %vm642 = vcmp.gt.f32.partialorder %v638, 0.0
      %v643 = vmul.f32 %v635, 0.01
      %v644 = vmul.f32 %v638, 0.01
      %v645 = vsel %vm641, %v635, %v643
      %v646 = vsel %vm642, %v638, %v644
      %v647 = vpack.c.bf16 %v646, %v645
      %v649 = vunpack.c.l.b16 %v647
      %v650 = vunpack.c.h.b16 %v647
      %v651 = vpack.c.b16 %v649, %v649
      %v652 = vpack.c.b16 %v650, %v650
      %655 = vst [vmem:[%s280] sm:$0xf] %v651
      %656 = vst [vmem:[%s280 + $0x4] sm:$0xf] %v652
      %s657 = smul.u32 2, %s18
      %p658 = scmp.lt.s32.totalorder %s657, 5
      %s659 = scalar_select %p658, %s657, 5
      %s660 = smul.addr %s659, 4
      %s661 = scalar_lea.vmem %s7, %s660
      // Predicated region
      $region49: #{dti_conv_graph3_forward.1} parent=47 // pred_check
        %p662 = pneg %p188
      $region50: #{dti_conv_graph3_forward.1} parent=47 // pred_check_branch
        %664 = sbr.rel (%p662) target = $region52
      $region51: #{dti_conv_graph3_forward.1} parent=47 // pred_region
        %s665 = smul.u32 2, %s18
      $region52: #{dti_conv_graph3_forward.1} parent=47 // pred_fallthru
        _
    $region48: #{dti_conv_graph3_forward.1} parent=5 // pred_fallthru
      _
    %p666 = scmp.le.s32.totalorder 2, %s13
    // Predicated region
    $region53: #{dti_conv_graph3_forward.1} parent=5 // pred_check
      %p667 = pneg %p666
    $region54: #{dti_conv_graph3_forward.1} parent=5 // pred_check_branch
      %669 = sbr.rel (%p667) target = $region56
    $region55: #{dti_conv_graph3_forward.1} parent=5 // pred_region
      %s670 = ssub.s32 %s13, 2
      // Predicated region
      $region57: #{dti_conv_graph3_forward.1} parent=55 // pred_check
        %p671 = pneg %p194
      $region58: #{dti_conv_graph3_forward.1} parent=55 // pred_check_branch
        %673 = sbr.rel (%p671) target = $region60
      $region59: #{dti_conv_graph3_forward.1} parent=55 // pred_region
        %s674 = smul.u32 2, %s19
        %p675 = scmp.lt.s32.totalorder %s674, 5
        %s676 = scalar_select %p675, %s674, 5
        %s677 = smul.addr %s676, 4
        %s678 = scalar_lea.vmem %s7, %s677
      $region60: #{dti_conv_graph3_forward.1} parent=55 // pred_fallthru
        _
    $region56: #{dti_conv_graph3_forward.1} parent=5 // pred_fallthru
      _
  $region6: #{dti_conv_graph3_forward.1} parent=0 // loop_footer
    %s17 = sadd.s32 1, %s13
  $region7: #{dti_conv_graph3_forward.1} parent=0 // loop_footer_branch
    %12 = sbr.rel target = $region3
  $region8: #{dti_conv_graph3_forward.1} parent=0 // loop_exit
    _

</llo_original>
